<compile_context>
chip_gen: v5e
topology: v5e:2x2
jax: 0.10.0
libtpu: 0.0.40
codegen_flags: <defaults>
</compile_context>

<pallas_src>
import functools

import jax
import jax.numpy as jnp
from jax import lax
from jax.experimental import pallas as pl
from jax.experimental.pallas import tpu as pltpu


def conv3x3_relu_kernel(w_ref, p_ref, o_ref, *, nb):
    # w_ref: (Cout, K32)     bf16  flattened OIHW weights | bias column | zero pad
    # p_ref: (NB, K32, HW)   bf16  im2col patches (+ ones row, + zero rows), lane = H*W
    # o_ref: (NB, Cout, HW)  f32   lane-dense output block
    w = w_ref[...]

    def body(i, carry):
        acc = jnp.dot(w, p_ref[i], preferred_element_type=jnp.float32)
        o_ref[i] = jnp.maximum(acc, 0.0).astype(o_ref.dtype)
        return carry

    lax.fori_loop(0, nb, body, 0, unroll=True)


@jax.jit
def conv_relu(x_nchw, w_oihw, bias):
    """Forward of Mod: ReLU(Conv2d(x)), matching PyTorch NCHW semantics."""
    N, Cin, H, W = x_nchw.shape
    Cout, _, KH, KW = w_oihw.shape
    HW = H * W
    KKC = Cin * KH * KW            # 27
    K32 = 32                       # 27 taps + 1 bias(ones) row + 4 zero rows
    NB = min(N, 8)                 # images per grid step
    n_steps = -(-N // NB)
    Npad = n_steps * NB

    # ---- wrapper-side pre-layout (fused by jit, emitted directly in bf16) ----
    x = x_nchw.astype(jnp.float32)
    x_pad = jnp.pad(x, ((0, 0), (0, 0), (1, 1), (1, 1)))
    # im2col with k-index = c*KH*KW + kh*KW + kw, matching OIHW flattening.
    slabs = [x_pad[:, :, kh:kh + H, kw:kw + W]
             for kh in range(KH) for kw in range(KW)]           # 9 x (N,Cin,H,W)
    patches = jnp.stack(slabs, axis=2).reshape(N, KKC, HW)      # (N, 27, HW)
    ones = jnp.ones((N, 1, HW), jnp.float32)                    # bias row
    zpad = jnp.zeros((N, K32 - KKC - 1, HW), jnp.float32)       # pad K to 32
    patches = jnp.concatenate([patches, ones, zpad], axis=1)    # (N, 32, HW)
    if Npad != N:
        patches = jnp.pad(patches, ((0, Npad - N), (0, 0), (0, 0)))
    patches = patches.astype(jnp.bfloat16)

    w2d = w_oihw.reshape(Cout, KKC).astype(jnp.float32)
    wb = jnp.concatenate(
        [w2d,
         bias.reshape(Cout, 1).astype(jnp.float32),
         jnp.zeros((Cout, K32 - KKC - 1), jnp.float32)],
        axis=1).astype(jnp.bfloat16)                            # (Cout, 32)

    kernel = functools.partial(conv3x3_relu_kernel, nb=NB)
    out = pl.pallas_call(
        kernel,
        out_shape=jax.ShapeDtypeStruct((Npad, Cout, HW), jnp.float32),
        grid=(n_steps,),
        in_specs=[
            pl.BlockSpec((Cout, K32), lambda g: (0, 0)),          # weights+bias
            pl.BlockSpec((NB, K32, HW), lambda g: (g, 0, 0)),     # patches
        ],
        out_specs=pl.BlockSpec((NB, Cout, HW), lambda g: (g, 0, 0)),
        compiler_params=pltpu.CompilerParams(
            dimension_semantics=("parallel",),
            vmem_limit_bytes=4 * 1024 * 1024),
    )(wb, patches)

    # NCHW result is a free reshape of the (N, Cout, H*W) kernel output.
    return out[:N].reshape(N, Cout, H, W)


if __name__ == "__main__":
    key = jax.random.PRNGKey(0)
    kx, kw, kb = jax.random.split(key, 3)

    N, Cin, H, W = 2, 3, 16, 16
    Cout, K = 16, 3

    x = jax.random.normal(kx, (N, Cin, H, W), dtype=jnp.float32)
    # Deterministic params (shapes from Conv2d(3, 16, 3), OIHW + bias).
    fan_in = Cin * K * K
    bound = 1.0 / (fan_in ** 0.5)
    w = jax.random.uniform(kw, (Cout, Cin, K, K), minval=-bound, maxval=bound,
                           dtype=jnp.float32)
    b = jax.random.uniform(kb, (Cout,), minval=-bound, maxval=bound,
                           dtype=jnp.float32)

    out = jax.block_until_ready(conv_relu(x, w, b))

    # Reference check against XLA conv (same semantics as torch Conv2d + ReLU).
    ref = lax.conv_general_dilated(
        x, w, window_strides=(1, 1), padding=((1, 1), (1, 1)),
        dimension_numbers=("NCHW", "OIHW", "NCHW"))
    ref = jnp.maximum(ref + b.reshape(1, Cout, 1, 1), 0.0)
    assert out.shape == (N, Cout, H, W)
    # bf16 MXU operands (f32 accumulate) -> relaxed tolerance vs. f32 reference.
    assert jnp.allclose(out, ref, atol=2e-2, rtol=2e-2), \
        float(jnp.max(jnp.abs(out - ref)))

    print("KERNEL_OK")
</pallas_src>

<mosaic_0001>
module attributes {stable_mosaic.version = 11 : i64} {
  func.func @conv3x3_relu_kernel(%arg0: i32, %arg1: memref<16x32xbf16, #tpu.memory_space<vmem>>, %arg2: memref<2x32x256xbf16, #tpu.memory_space<vmem>>, %arg3: memref<2x16x256xf32, #tpu.memory_space<vmem>>) attributes {dimension_semantics = [#tpu.dimension_semantics<parallel>], iteration_bounds = array<i64: 1>, scalar_prefetch = 0 : i64, scratch_operands = 0 : i64, tpu.core_type = #tpu.core_type<tc>, window_params = [{pipeline_mode = #tpu.pipeline_mode<synchronous>, transform_indices = @transform_0, window_bounds = array<i64: 16, 32>}, {transform_indices = @transform_1, window_bounds = array<i64: 2, 32, 256>}, {transform_indices = @transform_2, window_bounds = array<i64: 2, 16, 256>}]} {
    %c0 = arith.constant 0 : index
    %c0_0 = arith.constant 0 : index
    %0 = vector.load %arg1[%c0, %c0_0] : memref<16x32xbf16, #tpu.memory_space<vmem>>, vector<16x32xbf16>
    %c0_i32 = arith.constant 0 : i32
    %1 = arith.index_cast %c0_i32 : i32 to index
    %c0_1 = arith.constant 0 : index
    %c0_2 = arith.constant 0 : index
    %2 = vector.load %arg2[%1, %c0_1, %c0_2] : memref<2x32x256xbf16, #tpu.memory_space<vmem>>, vector<1x32x256xbf16>
    %3 = vector.shape_cast %2 : vector<1x32x256xbf16> to vector<32x256xbf16>
    %cst = arith.constant dense<0.000000e+00> : vector<16x256xf32>
    %4 = tpu.matmul %0, %3, %cst {dimension_numbers = #tpu.dot_dimension_numbers<[1], [0], [0], [1], [0, 0, 1, 1], [], []>} : vector<16x32xbf16>, vector<32x256xbf16>, vector<16x256xf32> -> vector<16x256xf32>
    %cst_3 = arith.constant 0.000000e+00 : f32
    %5 = vector.broadcast %cst_3 : f32 to vector<16x256xf32>
    %6 = arith.maximumf %4, %5 : vector<16x256xf32>
    %7 = arith.index_cast %c0_i32 : i32 to index
    %c0_4 = arith.constant 0 : index
    %c0_5 = arith.constant 0 : index
    %8 = vector.load %arg3[%7, %c0_4, %c0_5] : memref<2x16x256xf32, #tpu.memory_space<vmem>>, vector<1x16x256xf32>
    %9 = vector.shape_cast %8 : vector<1x16x256xf32> to vector<16x256xf32>
    %10 = vector.shape_cast %6 : vector<16x256xf32> to vector<1x16x256xf32>
    tpu.vector_store %arg3[%7, %c0_4, %c0_5], %10 {strides = array<i32>} : memref<2x16x256xf32, #tpu.memory_space<vmem>>, vector<1x16x256xf32>,
    %c1_i32 = arith.constant 1 : i32
    %11 = arith.index_cast %c1_i32 : i32 to index
    %c0_6 = arith.constant 0 : index
    %c0_7 = arith.constant 0 : index
    %12 = vector.load %arg2[%11, %c0_6, %c0_7] : memref<2x32x256xbf16, #tpu.memory_space<vmem>>, vector<1x32x256xbf16>
    %13 = vector.shape_cast %12 : vector<1x32x256xbf16> to vector<32x256xbf16>
    %cst_8 = arith.constant dense<0.000000e+00> : vector<16x256xf32>
    %14 = tpu.matmul %0, %13, %cst_8 {dimension_numbers = #tpu.dot_dimension_numbers<[1], [0], [0], [1], [0, 0, 1, 1], [], []>} : vector<16x32xbf16>, vector<32x256xbf16>, vector<16x256xf32> -> vector<16x256xf32>
    %cst_9 = arith.constant 0.000000e+00 : f32
    %15 = vector.broadcast %cst_9 : f32 to vector<16x256xf32>
    %16 = arith.maximumf %14, %15 : vector<16x256xf32>
    %17 = arith.index_cast %c1_i32 : i32 to index
    %c0_10 = arith.constant 0 : index
    %c0_11 = arith.constant 0 : index
    %18 = vector.load %arg3[%17, %c0_10, %c0_11] : memref<2x16x256xf32, #tpu.memory_space<vmem>>, vector<1x16x256xf32>
    %19 = vector.shape_cast %18 : vector<1x16x256xf32> to vector<16x256xf32>
    %20 = vector.shape_cast %16 : vector<16x256xf32> to vector<1x16x256xf32>
    tpu.vector_store %arg3[%17, %c0_10, %c0_11], %20 {strides = array<i32>} : memref<2x16x256xf32, #tpu.memory_space<vmem>>, vector<1x16x256xf32>,
    %c2_i32 = arith.constant 2 : i32
    return
  }
  func.func @transform_0(%arg0: i32) -> (i32, i32) {
    %c0_i32 = arith.constant 0 : i32
    %c0_i32_0 = arith.constant 0 : i32
    %c0_i32_1 = arith.constant 0 : i32
    return %c0_i32, %c0_i32_0 : i32, i32
  }
  func.func @transform_1(%arg0: i32) -> (i32, i32, i32) {
    %c0_i32 = arith.constant 0 : i32
    %c0_i32_0 = arith.constant 0 : i32
    %c0_i32_1 = arith.constant 0 : i32
    return %arg0, %c0_i32, %c0_i32_0 : i32, i32, i32
  }
  func.func @transform_2(%arg0: i32) -> (i32, i32, i32) {
    %c0_i32 = arith.constant 0 : i32
    %c0_i32_0 = arith.constant 0 : i32
    %c0_i32_1 = arith.constant 0 : i32
    return %arg0, %c0_i32, %c0_i32_0 : i32, i32, i32
  }
}

</mosaic_0001>

<llo_original>
// kernel: conv_relu.1
$region0: #{conv_relu.1}
  #allocation0 [shape = 'u32[]', space=smem, size = 0x4, offset = 0x4, fixed_abs, tag = 'smem constant byte address 0x4 - core index']
  #allocation1 [shape = 'u32[72,128]{1,0:T(1,128)}', space=vmem, size = 0x9000, scoped, tag = 'internal scratch']
  %s0 = inlined_call_operand.vmem [shape: bf16[16,32], index: 0, kind: input, shape index: {}]
  %s1 = inlined_call_operand.vmem [shape: bf16[2,32,256], index: 1, kind: input, shape index: {}]
  %s2 = inlined_call_operand.vmem [shape: f32[2,16,256], index: 2, kind: output, shape index: {}]
  %s3 = sld [smem:[#allocation0]]
  $region18: #{conv_relu.1} parent=0
    _
  %s5 = ssub.s32 1, %s3
  %s6 = scalar_select 0, %s5, %s3
  // Predicated region
  $region2: #{conv_relu.1} parent=0 // pred_check
    _
  $region3: #{conv_relu.1} parent=0 // pred_check_branch
    %8 = sbr.rel (0) target = $region5
  $region4: #{conv_relu.1} parent=0 // pred_region
    _
  $region5: #{conv_relu.1} parent=0 // pred_fallthru
    _
  // Predicated region
  $region6: #{conv_relu.1} parent=0 // pred_check
    _
  $region7: #{conv_relu.1} parent=0 // pred_check_branch
    %10 = sbr.rel (0) target = $region9
  $region8: #{conv_relu.1} parent=0 // pred_region
    _
  $region9: #{conv_relu.1} parent=0 // pred_fallthru
    _
  %v12 = vld [vmem:[%s0] sm:$0xf]
  %v13 = vld [vmem:[%s0 + $0x4] sm:$0xf]
  %v14 = vld [vmem:[%s1] sm:$0xff]
  %v15 = vld [vmem:[%s1 + $0x8] sm:$0xff]
  %v16 = vld [vmem:[%s1 + $0x10] sm:$0xff]
  %v17 = vld [vmem:[%s1 + $0x18] sm:$0xff]
  %v20 = vunpack.c.l.b16 %v12
  %v21 = vunpack.c.l.b16 %v13
  %v22 = vpack.c.b16 %v21, %v20
  %v27 = vunpack.c.l.b16 %v14
  %v28 = vunpack.c.h.b16 %v14
  %v29 = vunpack.c.l.b16 %v15
  %v30 = vunpack.c.h.b16 %v15
  %v31 = vunpack.c.l.b16 %v16
  %v32 = vunpack.c.h.b16 %v16
  %v33 = vunpack.c.l.b16 %v17
  %v34 = vunpack.c.h.b16 %v17
  %v35 = vpack.c.b16 %v29, %v27
  %v36 = vpack.c.b16 %v30, %v28
  %v37 = vpack.c.b16 %v33, %v31
  %v38 = vpack.c.b16 %v34, %v32
  %vm43 = vcmask 261120
  %v45 = vsel %vm43, %v22, 0
  %47 = vmatpush.bf16.msra.mxu0 0
  %48 = vmatpush.bf16.msra.mxu0 0
  %49 = vmatpush.bf16.msra.mxu0 0
  %50 = vmatpush.bf16.msra.mxu0 0
  %51 = vmatpush.bf16.msra.mxu0 0
  %52 = vmatpush.bf16.msra.mxu0 0
  %53 = vmatpush.bf16.msra.mxu0 %v37
  %54 = vmatpush.bf16.msra.mxu0 %v35
  %55 = vmatmul.bf16.gmra.mxu0 %v45
  %v56 = vpop.f32.mrf.mxu0
  %v57 = vadd.f32 0.0, %v56
  %v58 = vpop.f32.mrf.mxu0
  %v59 = vadd.f32 0.0, %v58
  %60 = vdwg.mxu0
  %61 = vmatpush.bf16.msra.mxu0 0
  %62 = vmatpush.bf16.msra.mxu0 0
  %63 = vmatpush.bf16.msra.mxu0 0
  %64 = vmatpush.bf16.msra.mxu0 0
  %65 = vmatpush.bf16.msra.mxu0 0
  %66 = vmatpush.bf16.msra.mxu0 0
  %67 = vmatpush.bf16.msra.mxu0 %v38
  %68 = vmatpush.bf16.msra.mxu0 %v36
  %69 = vmatmul.bf16.gmra.mxu0 %v45
  %v70 = vpop.f32.mrf.mxu0
  %v71 = vadd.f32 0.0, %v70
  %v72 = vpop.f32.mrf.mxu0
  %v73 = vadd.f32 0.0, %v72
  %74 = vdwg.mxu0
  %v75 = vmax.f32 %v57, 0.0
  %v76 = vmax.f32 %v71, 0.0
  %v77 = vmax.f32 %v59, 0.0
  %v78 = vmax.f32 %v73, 0.0
  %79 = vst [vmem:[%s2] sm:$0xff] %v75
  %80 = vst [vmem:[%s2 + $0x8] sm:$0xff] %v76
  %81 = vst [vmem:[%s2 + $0x10] sm:$0xff] %v77
  %82 = vst [vmem:[%s2 + $0x18] sm:$0xff] %v78
  %s83 = scalar_lea.vmem %s1, 32
  %v84 = vld [vmem:[%s83] sm:$0xff]
  %v85 = vld [vmem:[%s83 + $0x8] sm:$0xff]
  %v86 = vld [vmem:[%s83 + $0x10] sm:$0xff]
  %v87 = vld [vmem:[%s83 + $0x18] sm:$0xff]
  %v92 = vunpack.c.l.b16 %v84
  %v93 = vunpack.c.h.b16 %v84
  %v94 = vunpack.c.l.b16 %v85
  %v95 = vunpack.c.h.b16 %v85
  %v96 = vunpack.c.l.b16 %v86
  %v97 = vunpack.c.h.b16 %v86
  %v98 = vunpack.c.l.b16 %v87
  %v99 = vunpack.c.h.b16 %v87
  %v100 = vpack.c.b16 %v94, %v92
  %v101 = vpack.c.b16 %v95, %v93
  %v102 = vpack.c.b16 %v98, %v96
  %v103 = vpack.c.b16 %v99, %v97
  %108 = vmatpush.bf16.msra.mxu0 0
  %109 = vmatpush.bf16.msra.mxu0 0
  %110 = vmatpush.bf16.msra.mxu0 0
  %111 = vmatpush.bf16.msra.mxu0 0
  %112 = vmatpush.bf16.msra.mxu0 0
  %113 = vmatpush.bf16.msra.mxu0 0
  %114 = vmatpush.bf16.msra.mxu0 %v102
  %115 = vmatpush.bf16.msra.mxu0 %v100
  %116 = vmatmul.bf16.gmra.mxu0 %v45
  %v117 = vpop.f32.mrf.mxu0
  %v118 = vadd.f32 0.0, %v117
  %v119 = vpop.f32.mrf.mxu0
  %v120 = vadd.f32 0.0, %v119
  %121 = vdwg.mxu0
  %122 = vmatpush.bf16.msra.mxu0 0
  %123 = vmatpush.bf16.msra.mxu0 0
  %124 = vmatpush.bf16.msra.mxu0 0
  %125 = vmatpush.bf16.msra.mxu0 0
  %126 = vmatpush.bf16.msra.mxu0 0
  %127 = vmatpush.bf16.msra.mxu0 0
  %128 = vmatpush.bf16.msra.mxu0 %v103
  %129 = vmatpush.bf16.msra.mxu0 %v101
  %130 = vmatmul.bf16.gmra.mxu0 %v45
  %v131 = vpop.f32.mrf.mxu0
  %v132 = vadd.f32 0.0, %v131
  %v133 = vpop.f32.mrf.mxu0
  %v134 = vadd.f32 0.0, %v133
  %135 = vdwg.mxu0
  %v136 = vmax.f32 %v118, 0.0
  %v137 = vmax.f32 %v132, 0.0
  %v138 = vmax.f32 %v120, 0.0
  %v139 = vmax.f32 %v134, 0.0
  %s140 = scalar_lea.vmem %s2, 32
  %141 = vst [vmem:[%s140] sm:$0xff] %v136
  %142 = vst [vmem:[%s140 + $0x8] sm:$0xff] %v137
  %143 = vst [vmem:[%s140 + $0x10] sm:$0xff] %v138
  %144 = vst [vmem:[%s140 + $0x18] sm:$0xff] %v139
  // Predicated region
  $region10: #{conv_relu.1} parent=0 // pred_check
    _
  $region11: #{conv_relu.1} parent=0 // pred_check_branch
    %146 = sbr.rel (0) target = $region13
  $region12: #{conv_relu.1} parent=0 // pred_region
    _
  $region13: #{conv_relu.1} parent=0 // pred_fallthru
    _
  // Predicated region
  $region14: #{conv_relu.1} parent=0 // pred_check
    _
  $region15: #{conv_relu.1} parent=0 // pred_check_branch
    %148 = sbr.rel (0) target = $region17
  $region16: #{conv_relu.1} parent=0 // pred_region
    _
  $region17: #{conv_relu.1} parent=0 // pred_fallthru
    _

</llo_original>
